<compile_context>
chip_gen: v5e
topology: v5e:2x2
jax: 0.10.0
libtpu: 0.0.40
codegen_flags: <defaults>
</compile_context>

<pallas_src>
import jax
import jax.numpy as jnp
from jax import lax
from jax.experimental import pallas as pl
from jax.experimental.pallas import tpu as pltpu


def _cdiv(a, b):
    return -(-a // b)


def _round_up(a, b):
    return ((a + b - 1) // b) * b


def linear_kernel(b_ref, x_ref, w_ref, o_ref):
    # b_ref: (1,)                  SMEM scalar bias (f32)
    # x_ref: (TM, ndim)            VMEM tile of input rows (pipelined)
    # w_ref: (8, ndim)             VMEM weight row replicated on 8 sublanes (resident)
    # o_ref: (1, TM//128, 1, 128)  lane-dense output: element (0, r, 0, lane)
    #                              is the result for row  i*TM + r*128 + lane.
    w8 = w_ref[...]
    bias = b_ref[0]
    r_blocks = o_ref.shape[1]  # static: TM // 128

    def body(r, carry):
        start = pl.multiple_of(r * 128, 128)
        xg = x_ref[pl.ds(start, 128), :]                      # (128, ndim)
        # (8, ndim) . (128, ndim)^T -> (8, 128); contraction over ndim. All 8
        # result rows are identical (replicated weight row); keep row 0. The
        # transposed-RHS form yields the 128 row-sums directly lane-dense, so
        # no cross-lane relayout of a column reduction is needed.
        acc = lax.dot_general(
            w8, xg,
            dimension_numbers=(((1,), (1,)), ((), ())),
            preferred_element_type=jnp.float32,
            precision=lax.Precision.HIGHEST,   # true-f32 passes; free (mem-bound)
        )
        o_ref[0, r] = (acc[0:1, :] + bias).astype(o_ref.dtype)
        return carry

    # fori_loop keeps register pressure flat for large TM; fully unroll only
    # short trip counts.
    unroll = True if r_blocks <= 8 else 8
    lax.fori_loop(0, r_blocks, body, 0, unroll=unroll)


def _vmem_capacity_bytes():
    # Generation-aware query; conservative fallback = v7x-class (64 MiB / TC).
    try:
        return int(pltpu.get_tpu_info().vmem_capacity_bytes)
    except Exception:
        return 64 * 1024 * 1024


def linear_forward(x, weight, bias, *, max_tile_rows=8192,
                   x_tile_budget_bytes=None):
    """Pallas equivalent of  x.mm(weight) + bias  (weight: [ndim,1], bias: [1])."""
    N, ndim = x.shape
    assert weight.shape == (ndim, 1)
    assert bias.shape == (1,)
    dtype = x.dtype
    itemsize = jnp.dtype(dtype).itemsize

    # VMEM bookkeeping with the lane-padded width: a (TM, 32) f32 block really
    # occupies TM x 128 lanes of VMEM.
    ndim_pad = _round_up(ndim, 128)
    bytes_per_row = ndim_pad * itemsize

    # Generation-aware budgets: v7x has only 64 MiB VMEM per TC; v5e/v6e 128 MiB.
    vmem_cap = _vmem_capacity_bytes()
    if x_tile_budget_bytes is None:
        x_tile_budget_bytes = (24 if vmem_cap <= 64 * 1024 * 1024 else 40) * 1024 * 1024
    vmem_limit = int(min(max(32 * 1024 * 1024, x_tile_budget_bytes + 24 * 1024 * 1024),
                         vmem_cap - 8 * 1024 * 1024))

    # Rows per grid step: multiple of 128 (lane-dense 128-row groups), capped so
    # the double-buffered x tiles (2 * TM * ndim_pad * itemsize) fit the budget.
    n128 = _round_up(N, 128)
    n_groups = n128 // 128
    tm_budget = max(128, (x_tile_budget_bytes // (2 * bytes_per_row)) // 128 * 128)
    tm = min(max_tile_rows, tm_budget, n128)
    # Prefer >= 8 grid steps (v7x megacore sharding of the "parallel" row axis,
    # better pipeline overlap), else >= 2, but only while each x tile still
    # moves enough HBM bytes to amortize the ~0.35 us per-step overhead.
    for steps, floor_bytes in ((8, 2 * 1024 * 1024), (2, 512 * 1024)):
        cand = _cdiv(n_groups, steps) * 128
        if cand < tm and cand * bytes_per_row >= floor_bytes:
            tm = cand
            break
    grid = _cdiv(N, tm)
    r_blocks = tm // 128

    # Weight as a lane-major row, replicated across 8 sublanes (full MXU LHS tile).
    w8 = jnp.broadcast_to(weight.astype(dtype).reshape(1, ndim), (8, ndim))
    b = bias.astype(jnp.float32)

    flops = 2 * N * ndim
    bytes_accessed = itemsize * (N * ndim + grid * tm + 8 * ndim) + 4

    out4d = pl.pallas_call(
        linear_kernel,
        out_shape=jax.ShapeDtypeStruct((grid, r_blocks, 1, 128), dtype),
        grid=(grid,),
        in_specs=[
            pl.BlockSpec(memory_space=pltpu.SMEM),          # bias scalar
            pl.BlockSpec((tm, ndim), lambda i: (i, 0)),     # x tile (pipelined; ragged tail OK)
            pl.BlockSpec((8, ndim), lambda i: (0, 0)),      # weight (resident)
        ],
        out_specs=pl.BlockSpec((1, r_blocks, 1, 128), lambda i: (i, 0, 0, 0)),
        compiler_params=pltpu.CompilerParams(
            dimension_semantics=("parallel",),
            vmem_limit_bytes=vmem_limit,
        ),
        cost_estimate=pl.CostEstimate(
            flops=flops, transcendentals=0, bytes_accessed=bytes_accessed),
    )(b, x, w8)

    # Lane-dense (grid, TM//128, 1, 128) -> (N, 1); garbage rows past N dropped.
    return out4d.reshape(grid * tm)[:N].reshape(N, 1)


if __name__ == "__main__":
    key = jax.random.PRNGKey(0)
    kx, kw, kb, kx2, kw2, kx3, kw3 = jax.random.split(key, 7)

    # Small case consistent with the module: N=8 rows, ndim=32 features.
    N, ndim = 8, 32
    x = jax.random.normal(kx, (N, ndim), dtype=jnp.float32)
    weight = jax.random.normal(kw, (ndim, 1), dtype=jnp.float32)
    bias = jax.random.normal(kb, (1,), dtype=jnp.float32)

    out = linear_forward(x, weight, bias)
    jax.block_until_ready(out)
    ref = x @ weight + bias
    assert out.shape == (N, 1)
    assert jnp.allclose(out, ref, atol=1e-4, rtol=1e-4)

    # Multi-step pipelined grid with a ragged last row tile (no wrapper pad).
    N2, ndim2 = 2176, 64
    x2 = jax.random.normal(kx2, (N2, ndim2), dtype=jnp.float32)
    w2 = jax.random.normal(kw2, (ndim2, 1), dtype=jnp.float32)
    out2 = linear_forward(x2, w2, bias)
    jax.block_until_ready(out2)
    ref2 = x2 @ w2 + bias
    assert out2.shape == (N2, 1)
    assert jnp.allclose(out2, ref2, atol=1e-4, rtol=1e-4)

    # N not a multiple of 128 and ndim not a multiple of 128.
    N3, ndim3 = 1000, 96
    x3 = jax.random.normal(kx3, (N3, ndim3), dtype=jnp.float32)
    w3 = jax.random.normal(kw3, (ndim3, 1), dtype=jnp.float32)
    out3 = linear_forward(x3, w3, bias)
    jax.block_until_ready(out3)
    ref3 = x3 @ w3 + bias
    assert out3.shape == (N3, 1)
    assert jnp.allclose(out3, ref3, atol=1e-4, rtol=1e-4)

    print("KERNEL_OK")
</pallas_src>

<mosaic_0001>
module attributes {stable_mosaic.version = 11 : i64} {
  func.func @linear_kernel(%arg0: i32, %arg1: memref<1xf32, #tpu.memory_space<smem>>, %arg2: memref<128x32xf32, #tpu.memory_space<vmem>>, %arg3: memref<8x32xf32, #tpu.memory_space<vmem>>, %arg4: memref<1x1x1x128xf32, #tpu.memory_space<vmem>>) attributes {dimension_semantics = [#tpu.dimension_semantics<parallel>], iteration_bounds = array<i64: 1>, scalar_prefetch = 0 : i64, scratch_operands = 0 : i64, tpu.core_type = #tpu.core_type<tc>, window_params = [{transform_indices = @transform_0, window_bounds = array<i64: 1>}, {transform_indices = @transform_1, window_bounds = array<i64: 128, 32>}, {pipeline_mode = #tpu.pipeline_mode<synchronous>, transform_indices = @transform_2, window_bounds = array<i64: 8, 32>}, {transform_indices = @transform_3, window_bounds = array<i64: 1, 1, 1, 128>}]} {
    %c0 = arith.constant 0 : index
    %c0_0 = arith.constant 0 : index
    %0 = vector.load %arg3[%c0, %c0_0] : memref<8x32xf32, #tpu.memory_space<vmem>>, vector<8x32xf32>
    %c0_1 = arith.constant 0 : index
    %1 = memref.load %arg1[%c0_1] : memref<1xf32, #tpu.memory_space<smem>>
    %c0_i32 = arith.constant 0 : i32
    %c128_i32 = arith.constant 128 : i32
    %2 = arith.muli %c0_i32, %c128_i32 : i32
    %3 = tpu.assume_multiple %2, 128 : i32
    %4 = arith.index_cast %3 : i32 to index
    %c0_2 = arith.constant 0 : index
    %5 = vector.load %arg2[%4, %c0_2] : memref<128x32xf32, #tpu.memory_space<vmem>>, vector<128x32xf32>
    %cst = arith.constant dense<0.000000e+00> : vector<8x128xf32>
    %6 = tpu.matmul %0, %5, %cst {dimension_numbers = #tpu.dot_dimension_numbers<[1], [1], [0], [0], [0, 0, 1, 0], [], []>, precision = #tpu.contract_precision<fp32>} : vector<8x32xf32>, vector<128x32xf32>, vector<8x128xf32> -> vector<8x128xf32>
    %7 = vector.extract_strided_slice %6 {offsets = [0, 0], sizes = [1, 128], strides = [1, 1]} : vector<8x128xf32> to vector<1x128xf32>
    %8 = vector.broadcast %1 : f32 to vector<1x128xf32>
    %9 = arith.addf %7, %8 : vector<1x128xf32>
    %c0_3 = arith.constant 0 : index
    %10 = arith.index_cast %c0_i32 : i32 to index
    %c0_4 = arith.constant 0 : index
    %c0_5 = arith.constant 0 : index
    %11 = vector.load %arg4[%c0_3, %10, %c0_4, %c0_5] : memref<1x1x1x128xf32, #tpu.memory_space<vmem>>, vector<1x1x1x128xf32>
    %12 = vector.shape_cast %11 : vector<1x1x1x128xf32> to vector<1x128xf32>
    %13 = vector.shape_cast %9 : vector<1x128xf32> to vector<1x1x1x128xf32>
    tpu.vector_store %arg4[%c0_3, %10, %c0_4, %c0_5], %13 {strides = array<i32>} : memref<1x1x1x128xf32, #tpu.memory_space<vmem>>, vector<1x1x1x128xf32>,
    %c1_i32 = arith.constant 1 : i32
    return
  }
  func.func @transform_0(%arg0: i32) -> i32 {
    %c0_i32 = arith.constant 0 : i32
    %c0_i32_0 = arith.constant 0 : i32
    return %c0_i32 : i32
  }
  func.func @transform_1(%arg0: i32) -> (i32, i32) {
    %c0_i32 = arith.constant 0 : i32
    %c0_i32_0 = arith.constant 0 : i32
    return %arg0, %c0_i32 : i32, i32
  }
  func.func @transform_2(%arg0: i32) -> (i32, i32) {
    %c0_i32 = arith.constant 0 : i32
    %c0_i32_0 = arith.constant 0 : i32
    %c0_i32_1 = arith.constant 0 : i32
    return %c0_i32, %c0_i32_0 : i32, i32
  }
  func.func @transform_3(%arg0: i32) -> (i32, i32, i32, i32) {
    %c0_i32 = arith.constant 0 : i32
    %c0_i32_0 = arith.constant 0 : i32
    %c0_i32_1 = arith.constant 0 : i32
    %c0_i32_2 = arith.constant 0 : i32
    return %arg0, %c0_i32, %c0_i32_0, %c0_i32_1 : i32, i32, i32, i32
  }
}

</mosaic_0001>

<llo_original>
// kernel: tpu_custom_call.1
$region0: #{tpu_custom_call.1}
  #allocation0 [shape = 'u32[]', space=smem, size = 0x4, offset = 0x4, fixed_abs, tag = 'smem constant byte address 0x4 - core index']
  #allocation1 [shape = 'u32[72,128]{1,0:T(1,128)}', space=vmem, size = 0x9000, scoped, tag = 'internal scratch']
  #allocation2 [shape = 'f32[1]{0:T(128)S(6)}', space=smem, size = 0x200, scoped, tag = 'scoped memory for tpu_custom_call.1']
  %s0 = inlined_call_operand.<no memory space> [shape: f32[1], index: 0, kind: input, shape index: {}]
  %s1 = inlined_call_operand.hbm [shape: f32[8,32], index: 1, kind: input, shape index: {}]
  %s2 = inlined_call_operand.hbm [shape: f32[8,32], index: 2, kind: input, shape index: {}]
  %s3 = inlined_call_operand.hbm [shape: f32[1,1,1,128], index: 3, kind: output, shape index: {}]
  %s4 = sld [smem:[#allocation0]]
  $region30: #{tpu_custom_call.1} parent=0
    _
  %s6 = ssub.s32 1, %s4
  %s7 = scalar_select 0, %s6, %s4
  %8 = sst [smem:[#allocation2]] %s0
  $region1: #{tpu_custom_call.1} parent=0
    #allocation3 [shape = 'u8[65536]{0}', space=vmem, size = 0x10000, scoped, tag = 'input window, operand 1, single buffered']
    #allocation4 [shape = 's32[1]{0}', space=sflag, size = 0x4, scoped, tag = 'scoped memory for tpu_custom_call.1']
    #allocation5 [shape = 's32[1]{0}', space=sflag, size = 0x4, scoped, tag = 'scoped memory for tpu_custom_call.1']
    #allocation6 [shape = 'u8[4096]{0}', space=vmem, size = 0x1000, scoped, tag = 'input window, operand 2, single buffered']
    #allocation7 [shape = 's32[1]{0}', space=sflag, size = 0x4, scoped, tag = 'scoped memory for tpu_custom_call.1']
    #allocation8 [shape = 'u8[512]{0}', space=vmem, size = 0x400, scoped, tag = 'output window, operand 0, single buffered']
    %9 = vsyncpa [#allocation4], 0
    %10 = vsyncpa [#allocation7], 0
    %11 = vsyncpa [#allocation5], 0
    // Predicated region
    $region2: #{tpu_custom_call.1} parent=1 // pred_check
      _
    $region3: #{tpu_custom_call.1} parent=1 // pred_check_branch
      %13 = sbr.rel (0) target = $region5
    $region4: #{tpu_custom_call.1} parent=1 // pred_region
      _
    $region5: #{tpu_custom_call.1} parent=1 // pred_fallthru
      _
    // Predicated region
    $region6: #{tpu_custom_call.1} parent=1 // pred_check
      _
    $region7: #{tpu_custom_call.1} parent=1 // pred_check_branch
      %15 = sbr.rel (0) target = $region9
    $region8: #{tpu_custom_call.1} parent=1 // pred_region
      %17 = vsyncadd [#allocation4], 1920
      %s18 = sshll.u32 %s1, 4
      %s19 = int_to_ptr.hbm [resolvable:$true] %s18
      %s20 = sshll.u32 [#allocation3], 4
      %s21 = int_to_ptr.vmem [resolvable:$true] %s20
      %26 = dma.hbm_to_vmem [thread:$0]  %s19, 128, %s21, [#allocation4], 128, 128, 8
    $region9: #{tpu_custom_call.1} parent=1 // pred_fallthru
      _
    // Predicated region
    $region10: #{tpu_custom_call.1} parent=1 // pred_check
      _
    $region11: #{tpu_custom_call.1} parent=1 // pred_check_branch
      %28 = sbr.rel (0) target = $region13
    $region12: #{tpu_custom_call.1} parent=1 // pred_region
      %30 = vsyncadd [#allocation7], 0
      %s32 = sshll.u32 %s2, 4
      %s33 = int_to_ptr.hbm [resolvable:$true] %s32
      %s34 = sshll.u32 [#allocation6], 4
      %s35 = int_to_ptr.vmem [resolvable:$true] %s34
      %37 = dma.hbm_to_vmem [thread:$0]  %s33, 128, %s35, [#allocation7]
    $region13: #{tpu_custom_call.1} parent=1 // pred_fallthru
      _
    // Predicated region
    $region14: #{tpu_custom_call.1} parent=1 // pred_check
      _
    $region15: #{tpu_custom_call.1} parent=1 // pred_check_branch
      %39 = sbr.rel (0) target = $region17
    $region16: #{tpu_custom_call.1} parent=1 // pred_region
      %41 = dma.done [#allocation4], 2048
    $region17: #{tpu_custom_call.1} parent=1 // pred_fallthru
      _
    // Predicated region
    $region18: #{tpu_custom_call.1} parent=1 // pred_check
      _
    $region19: #{tpu_custom_call.1} parent=1 // pred_check_branch
      %43 = sbr.rel (0) target = $region21
    $region20: #{tpu_custom_call.1} parent=1 // pred_region
      %45 = dma.done [#allocation7], 128
    $region21: #{tpu_custom_call.1} parent=1 // pred_fallthru
      _
    %v46 = vld [vmem:[#allocation6] sm:$0xff]
    %s47 = sld [smem:[#allocation2]]
    %v48 = vld [vmem:[#allocation3] sm:$0xff]
    %v49 = vld [vmem:[#allocation3 + $0x8] sm:$0xff]
    %v50 = vld [vmem:[#allocation3 + $0x10] sm:$0xff]
    %v51 = vld [vmem:[#allocation3 + $0x18] sm:$0xff]
    %v52 = vld [vmem:[#allocation3 + $0x20] sm:$0xff]
    %v53 = vld [vmem:[#allocation3 + $0x28] sm:$0xff]
    %v54 = vld [vmem:[#allocation3 + $0x30] sm:$0xff]
    %v55 = vld [vmem:[#allocation3 + $0x38] sm:$0xff]
    %v56 = vld [vmem:[#allocation3 + $0x40] sm:$0xff]
    %v57 = vld [vmem:[#allocation3 + $0x48] sm:$0xff]
    %v58 = vld [vmem:[#allocation3 + $0x50] sm:$0xff]
    %v59 = vld [vmem:[#allocation3 + $0x58] sm:$0xff]
    %v60 = vld [vmem:[#allocation3 + $0x60] sm:$0xff]
    %v61 = vld [vmem:[#allocation3 + $0x68] sm:$0xff]
    %v62 = vld [vmem:[#allocation3 + $0x70] sm:$0xff]
    %v63 = vld [vmem:[#allocation3 + $0x78] sm:$0xff]
    %vm64 = vcmask 261120
    %v66 = vsel %vm64, %v46, 0
    %v69 = vsel %vm64, %v48, 0
    %v72 = vsel %vm64, %v49, 0
    %v75 = vsel %vm64, %v50, 0
    %v78 = vsel %vm64, %v51, 0
    %v81 = vsel %vm64, %v52, 0
    %v84 = vsel %vm64, %v53, 0
    %v87 = vsel %vm64, %v54, 0
    %v90 = vsel %vm64, %v55, 0
    %v93 = vsel %vm64, %v56, 0
    %v96 = vsel %vm64, %v57, 0
    %v99 = vsel %vm64, %v58, 0
    %v102 = vsel %vm64, %v59, 0
    %v105 = vsel %vm64, %v60, 0
    %v108 = vsel %vm64, %v61, 0
    %v111 = vsel %vm64, %v62, 0
    %v114 = vsel %vm64, %v63, 0
    %v116 = vand.u32 %v114, 4294901760
    %117 = vmatpush.xpose.msra.mxu0 %v116
    %v118 = vand.u32 %v111, 4294901760
    %119 = vmatpush.xpose.msra.mxu0 %v118
    %v120 = vand.u32 %v108, 4294901760
    %121 = vmatpush.xpose.msra.mxu0 %v120
    %v122 = vand.u32 %v105, 4294901760
    %123 = vmatpush.xpose.msra.mxu0 %v122
    %v124 = vand.u32 %v102, 4294901760
    %125 = vmatpush.xpose.msra.mxu0 %v124
    %v126 = vand.u32 %v99, 4294901760
    %127 = vmatpush.xpose.msra.mxu0 %v126
    %v128 = vand.u32 %v96, 4294901760
    %129 = vmatpush.xpose.msra.mxu0 %v128
    %v130 = vand.u32 %v93, 4294901760
    %131 = vmatpush.xpose.msra.mxu0 %v130
    %v132 = vand.u32 %v90, 4294901760
    %133 = vmatpush.xpose.msra.mxu0 %v132
    %v134 = vand.u32 %v87, 4294901760
    %135 = vmatpush.xpose.msra.mxu0 %v134
    %v136 = vand.u32 %v84, 4294901760
    %137 = vmatpush.xpose.msra.mxu0 %v136
    %v138 = vand.u32 %v81, 4294901760
    %139 = vmatpush.xpose.msra.mxu0 %v138
    %v140 = vand.u32 %v78, 4294901760
    %141 = vmatpush.xpose.msra.mxu0 %v140
    %v142 = vand.u32 %v75, 4294901760
    %143 = vmatpush.xpose.msra.mxu0 %v142
    %v144 = vand.u32 %v72, 4294901760
    %145 = vmatpush.xpose.msra.mxu0 %v144
    %v146 = vand.u32 %v69, 4294901760
    %147 = vmatpush.xpose.msra.mxu0 %v146
    %v148 = vand.u32 %v66, 4294901760
    %v149 = vsub.f32 %v66, %v148
    %v150 = vand.u32 %v149, 4294901760
    %v151 = vsub.f32 %v149, %v150
    %v152 = vand.u32 %v151, 4294901760
    %153 = vmatmul.f32.gmra.mxu0 %v152
    %v154 = vpop.f32.mrf.mxu0
    %v155 = vadd.f32 0.0, %v154
    %156 = vdwg.mxu0
    %v157 = vand.u32 %v114, 4294901760
    %v158 = vsub.f32 %v114, %v157
    %v159 = vand.u32 %v158, 4294901760
    %v160 = vsub.f32 %v158, %v159
    %v161 = vand.u32 %v160, 4294901760
    %162 = vmatpush.xpose.msra.mxu0 %v161
    %v163 = vand.u32 %v111, 4294901760
    %v164 = vsub.f32 %v111, %v163
    %v165 = vand.u32 %v164, 4294901760
    %v166 = vsub.f32 %v164, %v165
    %v167 = vand.u32 %v166, 4294901760
    %168 = vmatpush.xpose.msra.mxu0 %v167
    %v169 = vand.u32 %v108, 4294901760
    %v170 = vsub.f32 %v108, %v169
    %v171 = vand.u32 %v170, 4294901760
    %v172 = vsub.f32 %v170, %v171
    %v173 = vand.u32 %v172, 4294901760
    %174 = vmatpush.xpose.msra.mxu0 %v173
    %v175 = vand.u32 %v105, 4294901760
    %v176 = vsub.f32 %v105, %v175
    %v177 = vand.u32 %v176, 4294901760
    %v178 = vsub.f32 %v176, %v177
    %v179 = vand.u32 %v178, 4294901760
    %180 = vmatpush.xpose.msra.mxu0 %v179
    %v181 = vand.u32 %v102, 4294901760
    %v182 = vsub.f32 %v102, %v181
    %v183 = vand.u32 %v182, 4294901760
    %v184 = vsub.f32 %v182, %v183
    %v185 = vand.u32 %v184, 4294901760
    %186 = vmatpush.xpose.msra.mxu0 %v185
    %v187 = vand.u32 %v99, 4294901760
    %v188 = vsub.f32 %v99, %v187
    %v189 = vand.u32 %v188, 4294901760
    %v190 = vsub.f32 %v188, %v189
    %v191 = vand.u32 %v190, 4294901760
    %192 = vmatpush.xpose.msra.mxu0 %v191
    %v193 = vand.u32 %v96, 4294901760
    %v194 = vsub.f32 %v96, %v193
    %v195 = vand.u32 %v194, 4294901760
    %v196 = vsub.f32 %v194, %v195
    %v197 = vand.u32 %v196, 4294901760
    %198 = vmatpush.xpose.msra.mxu0 %v197
    %v199 = vand.u32 %v93, 4294901760
    %v200 = vsub.f32 %v93, %v199
    %v201 = vand.u32 %v200, 4294901760
    %v202 = vsub.f32 %v200, %v201
    %v203 = vand.u32 %v202, 4294901760
    %204 = vmatpush.xpose.msra.mxu0 %v203
    %v205 = vand.u32 %v90, 4294901760
    %v206 = vsub.f32 %v90, %v205
    %v207 = vand.u32 %v206, 4294901760
    %v208 = vsub.f32 %v206, %v207
    %v209 = vand.u32 %v208, 4294901760
    %210 = vmatpush.xpose.msra.mxu0 %v209
    %v211 = vand.u32 %v87, 4294901760
    %v212 = vsub.f32 %v87, %v211
    %v213 = vand.u32 %v212, 4294901760
    %v214 = vsub.f32 %v212, %v213
    %v215 = vand.u32 %v214, 4294901760
    %216 = vmatpush.xpose.msra.mxu0 %v215
    %v217 = vand.u32 %v84, 4294901760
    %v218 = vsub.f32 %v84, %v217
    %v219 = vand.u32 %v218, 4294901760
    %v220 = vsub.f32 %v218, %v219
    %v221 = vand.u32 %v220, 4294901760
    %222 = vmatpush.xpose.msra.mxu0 %v221
    %v223 = vand.u32 %v81, 4294901760
    %v224 = vsub.f32 %v81, %v223
    %v225 = vand.u32 %v224, 4294901760
    %v226 = vsub.f32 %v224, %v225
    %v227 = vand.u32 %v226, 4294901760
    %228 = vmatpush.xpose.msra.mxu0 %v227
    %v229 = vand.u32 %v78, 4294901760
    %v230 = vsub.f32 %v78, %v229
    %v231 = vand.u32 %v230, 4294901760
    %v232 = vsub.f32 %v230, %v231
    %v233 = vand.u32 %v232, 4294901760
    %234 = vmatpush.xpose.msra.mxu0 %v233
    %v235 = vand.u32 %v75, 4294901760
    %v236 = vsub.f32 %v75, %v235
    %v237 = vand.u32 %v236, 4294901760
    %v238 = vsub.f32 %v236, %v237
    %v239 = vand.u32 %v238, 4294901760
    %240 = vmatpush.xpose.msra.mxu0 %v239
    %v241 = vand.u32 %v72, 4294901760
    %v242 = vsub.f32 %v72, %v241
    %v243 = vand.u32 %v242, 4294901760
    %v244 = vsub.f32 %v242, %v243
    %v245 = vand.u32 %v244, 4294901760
    %246 = vmatpush.xpose.msra.mxu0 %v245
    %v247 = vand.u32 %v69, 4294901760
    %v248 = vsub.f32 %v69, %v247
    %v249 = vand.u32 %v248, 4294901760
    %v250 = vsub.f32 %v248, %v249
    %v251 = vand.u32 %v250, 4294901760
    %252 = vmatpush.xpose.msra.mxu0 %v251
    %v253 = vand.u32 %v66, 4294901760
    %254 = vmatmul.f32.gmra.mxu0 %v253
    %v255 = vpop.f32.mrf.mxu0
    %v256 = vadd.f32 %v155, %v255
    %257 = vdwg.mxu0
    %v258 = vand.u32 %v114, 4294901760
    %v259 = vsub.f32 %v114, %v258
    %260 = vmatpush.xpose.msra.mxu0 %v259
    %v261 = vand.u32 %v111, 4294901760
    %v262 = vsub.f32 %v111, %v261
    %263 = vmatpush.xpose.msra.mxu0 %v262
    %v264 = vand.u32 %v108, 4294901760
    %v265 = vsub.f32 %v108, %v264
    %266 = vmatpush.xpose.msra.mxu0 %v265
    %v267 = vand.u32 %v105, 4294901760
    %v268 = vsub.f32 %v105, %v267
    %269 = vmatpush.xpose.msra.mxu0 %v268
    %v270 = vand.u32 %v102, 4294901760
    %v271 = vsub.f32 %v102, %v270
    %272 = vmatpush.xpose.msra.mxu0 %v271
    %v273 = vand.u32 %v99, 4294901760
    %v274 = vsub.f32 %v99, %v273
    %275 = vmatpush.xpose.msra.mxu0 %v274
    %v276 = vand.u32 %v96, 4294901760
    %v277 = vsub.f32 %v96, %v276
    %278 = vmatpush.xpose.msra.mxu0 %v277
    %v279 = vand.u32 %v93, 4294901760
    %v280 = vsub.f32 %v93, %v279
    %281 = vmatpush.xpose.msra.mxu0 %v280
    %v282 = vand.u32 %v90, 4294901760
    %v283 = vsub.f32 %v90, %v282
    %284 = vmatpush.xpose.msra.mxu0 %v283
    %v285 = vand.u32 %v87, 4294901760
    %v286 = vsub.f32 %v87, %v285
    %287 = vmatpush.xpose.msra.mxu0 %v286
    %v288 = vand.u32 %v84, 4294901760
    %v289 = vsub.f32 %v84, %v288
    %290 = vmatpush.xpose.msra.mxu0 %v289
    %v291 = vand.u32 %v81, 4294901760
    %v292 = vsub.f32 %v81, %v291
    %293 = vmatpush.xpose.msra.mxu0 %v292
    %v294 = vand.u32 %v78, 4294901760
    %v295 = vsub.f32 %v78, %v294
    %296 = vmatpush.xpose.msra.mxu0 %v295
    %v297 = vand.u32 %v75, 4294901760
    %v298 = vsub.f32 %v75, %v297
    %299 = vmatpush.xpose.msra.mxu0 %v298
    %v300 = vand.u32 %v72, 4294901760
    %v301 = vsub.f32 %v72, %v300
    %302 = vmatpush.xpose.msra.mxu0 %v301
    %v303 = vand.u32 %v69, 4294901760
    %v304 = vsub.f32 %v69, %v303
    %305 = vmatpush.xpose.msra.mxu0 %v304
    %v306 = vand.u32 %v66, 4294901760
    %v307 = vsub.f32 %v66, %v306
    %308 = vmatmul.f32.gmra.mxu0 %v307
    %v309 = vpop.f32.mrf.mxu0
    %v310 = vadd.f32 %v256, %v309
    %311 = vdwg.mxu0
    %v312 = vand.u32 %v114, 4294901760
    %313 = vmatpush.xpose.msra.mxu0 %v312
    %v314 = vand.u32 %v111, 4294901760
    %315 = vmatpush.xpose.msra.mxu0 %v314
    %v316 = vand.u32 %v108, 4294901760
    %317 = vmatpush.xpose.msra.mxu0 %v316
    %v318 = vand.u32 %v105, 4294901760
    %319 = vmatpush.xpose.msra.mxu0 %v318
    %v320 = vand.u32 %v102, 4294901760
    %321 = vmatpush.xpose.msra.mxu0 %v320
    %v322 = vand.u32 %v99, 4294901760
    %323 = vmatpush.xpose.msra.mxu0 %v322
    %v324 = vand.u32 %v96, 4294901760
    %325 = vmatpush.xpose.msra.mxu0 %v324
    %v326 = vand.u32 %v93, 4294901760
    %327 = vmatpush.xpose.msra.mxu0 %v326
    %v328 = vand.u32 %v90, 4294901760
    %329 = vmatpush.xpose.msra.mxu0 %v328
    %v330 = vand.u32 %v87, 4294901760
    %331 = vmatpush.xpose.msra.mxu0 %v330
    %v332 = vand.u32 %v84, 4294901760
    %333 = vmatpush.xpose.msra.mxu0 %v332
    %v334 = vand.u32 %v81, 4294901760
    %335 = vmatpush.xpose.msra.mxu0 %v334
    %v336 = vand.u32 %v78, 4294901760
    %337 = vmatpush.xpose.msra.mxu0 %v336
    %v338 = vand.u32 %v75, 4294901760
    %339 = vmatpush.xpose.msra.mxu0 %v338
    %v340 = vand.u32 %v72, 4294901760
    %341 = vmatpush.xpose.msra.mxu0 %v340
    %v342 = vand.u32 %v69, 4294901760
    %343 = vmatpush.xpose.msra.mxu0 %v342
    %v344 = vand.u32 %v66, 4294901760
    %v345 = vsub.f32 %v66, %v344
    %v346 = vand.u32 %v345, 4294901760
    %347 = vmatmul.f32.gmra.mxu0 %v346
    %v348 = vpop.f32.mrf.mxu0
    %v349 = vadd.f32 %v310, %v348
    %350 = vdwg.mxu0
    %v351 = vand.u32 %v114, 4294901760
    %v352 = vsub.f32 %v114, %v351
    %v353 = vand.u32 %v352, 4294901760
    %354 = vmatpush.xpose.msra.mxu0 %v353
    %v355 = vand.u32 %v111, 4294901760
    %v356 = vsub.f32 %v111, %v355
    %v357 = vand.u32 %v356, 4294901760
    %358 = vmatpush.xpose.msra.mxu0 %v357
    %v359 = vand.u32 %v108, 4294901760
    %v360 = vsub.f32 %v108, %v359
    %v361 = vand.u32 %v360, 4294901760
    %362 = vmatpush.xpose.msra.mxu0 %v361
    %v363 = vand.u32 %v105, 4294901760
    %v364 = vsub.f32 %v105, %v363
    %v365 = vand.u32 %v364, 4294901760
    %366 = vmatpush.xpose.msra.mxu0 %v365
    %v367 = vand.u32 %v102, 4294901760
    %v368 = vsub.f32 %v102, %v367
    %v369 = vand.u32 %v368, 4294901760
    %370 = vmatpush.xpose.msra.mxu0 %v369
    %v371 = vand.u32 %v99, 4294901760
    %v372 = vsub.f32 %v99, %v371
    %v373 = vand.u32 %v372, 4294901760
    %374 = vmatpush.xpose.msra.mxu0 %v373
    %v375 = vand.u32 %v96, 4294901760
    %v376 = vsub.f32 %v96, %v375
    %v377 = vand.u32 %v376, 4294901760
    %378 = vmatpush.xpose.msra.mxu0 %v377
    %v379 = vand.u32 %v93, 4294901760
    %v380 = vsub.f32 %v93, %v379
    %v381 = vand.u32 %v380, 4294901760
    %382 = vmatpush.xpose.msra.mxu0 %v381
    %v383 = vand.u32 %v90, 4294901760
    %v384 = vsub.f32 %v90, %v383
    %v385 = vand.u32 %v384, 4294901760
    %386 = vmatpush.xpose.msra.mxu0 %v385
    %v387 = vand.u32 %v87, 4294901760
    %v388 = vsub.f32 %v87, %v387
    %v389 = vand.u32 %v388, 4294901760
    %390 = vmatpush.xpose.msra.mxu0 %v389
    %v391 = vand.u32 %v84, 4294901760
    %v392 = vsub.f32 %v84, %v391
    %v393 = vand.u32 %v392, 4294901760
    %394 = vmatpush.xpose.msra.mxu0 %v393
    %v395 = vand.u32 %v81, 4294901760
    %v396 = vsub.f32 %v81, %v395
    %v397 = vand.u32 %v396, 4294901760
    %398 = vmatpush.xpose.msra.mxu0 %v397
    %v399 = vand.u32 %v78, 4294901760
    %v400 = vsub.f32 %v78, %v399
    %v401 = vand.u32 %v400, 4294901760
    %402 = vmatpush.xpose.msra.mxu0 %v401
    %v403 = vand.u32 %v75, 4294901760
    %v404 = vsub.f32 %v75, %v403
    %v405 = vand.u32 %v404, 4294901760
    %406 = vmatpush.xpose.msra.mxu0 %v405
    %v407 = vand.u32 %v72, 4294901760
    %v408 = vsub.f32 %v72, %v407
    %v409 = vand.u32 %v408, 4294901760
    %410 = vmatpush.xpose.msra.mxu0 %v409
    %v411 = vand.u32 %v69, 4294901760
    %v412 = vsub.f32 %v69, %v411
    %v413 = vand.u32 %v412, 4294901760
    %414 = vmatpush.xpose.msra.mxu0 %v413
    %v415 = vand.u32 %v66, 4294901760
    %416 = vmatmul.f32.gmra.mxu0 %v415
    %v417 = vpop.f32.mrf.mxu0
    %v418 = vadd.f32 %v349, %v417
    %419 = vdwg.mxu0
    %v420 = vand.u32 %v114, 4294901760
    %421 = vmatpush.xpose.msra.mxu0 %v420
    %v422 = vand.u32 %v111, 4294901760
    %423 = vmatpush.xpose.msra.mxu0 %v422
    %v424 = vand.u32 %v108, 4294901760
    %425 = vmatpush.xpose.msra.mxu0 %v424
    %v426 = vand.u32 %v105, 4294901760
    %427 = vmatpush.xpose.msra.mxu0 %v426
    %v428 = vand.u32 %v102, 4294901760
    %429 = vmatpush.xpose.msra.mxu0 %v428
    %v430 = vand.u32 %v99, 4294901760
    %431 = vmatpush.xpose.msra.mxu0 %v430
    %v432 = vand.u32 %v96, 4294901760
    %433 = vmatpush.xpose.msra.mxu0 %v432
    %v434 = vand.u32 %v93, 4294901760
    %435 = vmatpush.xpose.msra.mxu0 %v434
    %v436 = vand.u32 %v90, 4294901760
    %437 = vmatpush.xpose.msra.mxu0 %v436
    %v438 = vand.u32 %v87, 4294901760
    %439 = vmatpush.xpose.msra.mxu0 %v438
    %v440 = vand.u32 %v84, 4294901760
    %441 = vmatpush.xpose.msra.mxu0 %v440
    %v442 = vand.u32 %v81, 4294901760
    %443 = vmatpush.xpose.msra.mxu0 %v442
    %v444 = vand.u32 %v78, 4294901760
    %445 = vmatpush.xpose.msra.mxu0 %v444
    %v446 = vand.u32 %v75, 4294901760
    %447 = vmatpush.xpose.msra.mxu0 %v446
    %v448 = vand.u32 %v72, 4294901760
    %449 = vmatpush.xpose.msra.mxu0 %v448
    %v450 = vand.u32 %v69, 4294901760
    %451 = vmatpush.xpose.msra.mxu0 %v450
    %v452 = vand.u32 %v66, 4294901760
    %453 = vmatmul.f32.gmra.mxu0 %v452
    %v454 = vpop.f32.mrf.mxu0
    %v455 = vadd.f32 %v418, %v454
    %456 = vdwg.mxu0
    %v457 = vstv %s47
    %v458 = vadd.f32 %v455, %v457
    %459 = vst [vmem:[#allocation8] sm:$0x1] %v458
    // Predicated region
    $region22: #{tpu_custom_call.1} parent=1 // pred_check
      _
    $region23: #{tpu_custom_call.1} parent=1 // pred_check_branch
      %461 = sbr.rel (0) target = $region25
    $region24: #{tpu_custom_call.1} parent=1 // pred_region
      %463 = vsyncadd [#allocation5], 0
      %s465 = sshll.u32 [#allocation8], 4
      %s466 = int_to_ptr.vmem [resolvable:$true] %s465
      %s467 = sshll.u32 %s3, 4
      %s468 = int_to_ptr.hbm [resolvable:$true] %s467
      %470 = dma.vmem_to_hbm [thread:$0]  %s466, 16, %s468, [#allocation5]
    $region25: #{tpu_custom_call.1} parent=1 // pred_fallthru
      _
    // Predicated region
    $region26: #{tpu_custom_call.1} parent=1 // pred_check
      _
    $region27: #{tpu_custom_call.1} parent=1 // pred_check_branch
      %472 = sbr.rel (0) target = $region29
    $region28: #{tpu_custom_call.1} parent=1 // pred_region
      %474 = dma.done [#allocation5], 16
    $region29: #{tpu_custom_call.1} parent=1 // pred_fallthru
      _
    %475 = vsyncpa [#allocation4], 1
    %476 = vsyncpa [#allocation7], 1
    %477 = vsyncpa [#allocation5], 1

</llo_original>
